<compile_context>
chip_gen: v5e
topology: v5e:2x2
jax: 0.10.0
libtpu: 0.0.40
codegen_flags: <defaults>
</compile_context>

<pallas_src>
import jax
import jax.numpy as jnp
from jax.experimental import pallas as pl
from jax.experimental.pallas import tpu as pltpu

_LANE = 128      # lane width (last dim)
_SUBLANE = 8     # f32 sublane multiple (second-to-last dim)


def _round_up(n: int, m: int) -> int:
    return ((n + m - 1) // m) * m


def _head_kernel(x_ref, w_ref, b_ref, o_ref):
    # x_ref: (B_pad, D)   f32   -- CLS-token activations (resident, same tile every step)
    # w_ref: (D, TN)      bf16  -- pre-transposed, zero-padded weight tile
    # b_ref: (1, TN)      f32   -- zero-padded bias tile
    # o_ref: (B_pad, TN)  f32
    x_bf16 = x_ref[...].astype(jnp.bfloat16)               # MXU-native operand
    y = jnp.dot(x_bf16, w_ref[...], preferred_element_type=jnp.float32)
    o_ref[...] = (y + b_ref[...]).astype(o_ref.dtype)      # f32 VPU epilogue


def at_classification_head(x, weight, bias):
    """ATClassificationHead.forward: Linear(input_dim, num_classes)(x[0]).

    x: (S, B, D) float32; weight: (C, D) as stored by nn.Linear; bias: (C,).
    Returns (B, C) float32.
    """
    S, B, D = x.shape
    C = weight.shape[0]

    # ---- wrapper-side glue (layout plumbing, not compute) ------------------
    x0 = x[0]                                               # (B, D): first token

    B_pad = _round_up(max(B, 1), _SUBLANE)                  # sublane-aligned rows
    C_pad = _round_up(max(C, 1), _LANE)                     # lane-dense classes

    if B_pad != B:
        x0 = jnp.pad(x0, ((0, B_pad - B), (0, 0)))
    # Pad region of weight/bias must be zero so the sliced-back output is exact.
    w_t = weight.T
    b1d = bias
    if C_pad != C:
        w_t = jnp.pad(w_t, ((0, 0), (0, C_pad - C)))
        b1d = jnp.pad(b1d, (0, C_pad - C))
    w_t = w_t.astype(jnp.bfloat16)
    b2d = b1d.reshape(1, C_pad).astype(jnp.float32)

    # Tile the class dim: multiple of 128, bounded so 2 buffers of (D, tn)
    # weight + activations + output stay well under scoped VMEM on all chips.
    tn = next(t for t in (512, 256, 128) if C_pad % t == 0)
    grid = (C_pad // tn,)

    flops = 2 * B_pad * D * C_pad
    bytes_accessed = (x0.size * 4) + (w_t.size * 2) + (b2d.size * 4) \
        + (B_pad * C_pad * 4)

    out_padded = pl.pallas_call(
        _head_kernel,
        out_shape=jax.ShapeDtypeStruct((B_pad, C_pad), x.dtype),
        grid_spec=pltpu.PrefetchScalarGridSpec(
            num_scalar_prefetch=0,
            grid=grid,
            in_specs=[
                pl.BlockSpec((B_pad, D), lambda j: (0, 0)),   # activations
                pl.BlockSpec((D, tn), lambda j: (0, j)),      # weight tile
                pl.BlockSpec((1, tn), lambda j: (0, j)),      # bias tile
            ],
            out_specs=pl.BlockSpec((B_pad, tn), lambda j: (0, j)),
        ),
        compiler_params=pltpu.CompilerParams(
            dimension_semantics=("parallel",)),
        cost_estimate=pl.CostEstimate(
            flops=flops, transcendentals=0, bytes_accessed=bytes_accessed),
    )(x0, w_t, b2d)

    # Slice the padding back off.
    return out_padded[:B, :C]


if __name__ == "__main__":
    key = jax.random.PRNGKey(0)
    k_x, k_w, k_b = jax.random.split(key, 3)

    # Small shapes consistent with the module: seq=8, batch=4,
    # input_dim=32, num_classes=10.
    S, B, D, C = 8, 4, 32, 10

    x = jax.random.normal(k_x, (S, B, D), dtype=jnp.float32)

    # nn.Linear(input_dim, num_classes): weight (C, D), bias (C,).
    bound = 1.0 / float(D) ** 0.5
    weight = jax.random.uniform(k_w, (C, D), minval=-bound, maxval=bound,
                                dtype=jnp.float32)
    bias = jax.random.uniform(k_b, (C,), minval=-bound, maxval=bound,
                              dtype=jnp.float32)

    # LayerNorm(input_dim) exists in the module's __init__ but is unused in
    # forward, so it has no kernel counterpart.

    out = at_classification_head(x, weight, bias)
    jax.block_until_ready(out)
    assert out.shape == (B, C), out.shape

    # Exact-path reference: same bf16 MXU operands, f32 accumulate, f32 bias.
    ref_bf16 = (jnp.dot(x[0].astype(jnp.bfloat16),
                        weight.T.astype(jnp.bfloat16),
                        preferred_element_type=jnp.float32)
                + bias[None, :])
    assert jnp.allclose(out, ref_bf16, atol=1e-3, rtol=1e-3)

    # Full-precision module semantics (loose tol: bf16 weight quantization).
    ref_f32 = x[0] @ weight.T + bias[None, :]
    assert jnp.allclose(out, ref_f32, atol=5e-2, rtol=5e-2)

    print("KERNEL_OK")
</pallas_src>

<mosaic_0001>
module attributes {stable_mosaic.version = 11 : i64} {
  func.func @_head_kernel(%arg0: i32, %arg1: memref<8x32xf32, #tpu.memory_space<vmem>>, %arg2: memref<32x128xbf16, #tpu.memory_space<vmem>>, %arg3: memref<1x128xf32, #tpu.memory_space<vmem>>, %arg4: memref<8x128xf32, #tpu.memory_space<vmem>>) attributes {dimension_semantics = [#tpu.dimension_semantics<parallel>], iteration_bounds = array<i64: 1>, scalar_prefetch = 0 : i64, scratch_operands = 0 : i64, tpu.core_type = #tpu.core_type<tc>, window_params = [{pipeline_mode = #tpu.pipeline_mode<synchronous>, transform_indices = @transform_0, window_bounds = array<i64: 8, 32>}, {transform_indices = @transform_1, window_bounds = array<i64: 32, 128>}, {transform_indices = @transform_2, window_bounds = array<i64: 1, 128>}, {transform_indices = @transform_3, window_bounds = array<i64: 8, 128>}]} {
    %c0 = arith.constant 0 : index
    %c0_0 = arith.constant 0 : index
    %0 = vector.load %arg1[%c0, %c0_0] : memref<8x32xf32, #tpu.memory_space<vmem>>, vector<8x32xf32>
    %1 = arith.truncf %0 : vector<8x32xf32> to vector<8x32xbf16>
    %c0_1 = arith.constant 0 : index
    %c0_2 = arith.constant 0 : index
    %2 = vector.load %arg2[%c0_1, %c0_2] : memref<32x128xbf16, #tpu.memory_space<vmem>>, vector<32x128xbf16>
    %cst = arith.constant dense<0.000000e+00> : vector<8x128xf32>
    %3 = tpu.matmul %1, %2, %cst {dimension_numbers = #tpu.dot_dimension_numbers<[1], [0], [0], [1], [0, 0, 1, 1], [], []>} : vector<8x32xbf16>, vector<32x128xbf16>, vector<8x128xf32> -> vector<8x128xf32>
    %c0_3 = arith.constant 0 : index
    %c0_4 = arith.constant 0 : index
    %4 = vector.load %arg3[%c0_3, %c0_4] : memref<1x128xf32, #tpu.memory_space<vmem>>, vector<1x128xf32>
    %5 = vector.broadcast %4 : vector<1x128xf32> to vector<8x128xf32>
    %6 = arith.addf %3, %5 : vector<8x128xf32>
    %c0_5 = arith.constant 0 : index
    %c0_6 = arith.constant 0 : index
    %7 = vector.load %arg4[%c0_5, %c0_6] : memref<8x128xf32, #tpu.memory_space<vmem>>, vector<8x128xf32>
    tpu.vector_store %arg4[%c0_5, %c0_6], %6 {strides = array<i32>} : memref<8x128xf32, #tpu.memory_space<vmem>>, vector<8x128xf32>,
    return
  }
  func.func @transform_0(%arg0: i32) -> (i32, i32) {
    %c0_i32 = arith.constant 0 : i32
    %c0_i32_0 = arith.constant 0 : i32
    %c0_i32_1 = arith.constant 0 : i32
    return %c0_i32, %c0_i32_0 : i32, i32
  }
  func.func @transform_1(%arg0: i32) -> (i32, i32) {
    %c0_i32 = arith.constant 0 : i32
    %c0_i32_0 = arith.constant 0 : i32
    return %c0_i32, %arg0 : i32, i32
  }
  func.func @transform_2(%arg0: i32) -> (i32, i32) {
    %c0_i32 = arith.constant 0 : i32
    %c0_i32_0 = arith.constant 0 : i32
    return %c0_i32, %arg0 : i32, i32
  }
  func.func @transform_3(%arg0: i32) -> (i32, i32) {
    %c0_i32 = arith.constant 0 : i32
    %c0_i32_0 = arith.constant 0 : i32
    return %c0_i32, %arg0 : i32, i32
  }
}

</mosaic_0001>

<llo_original>
// kernel: tpu_custom_call.1
$region0: #{tpu_custom_call.1}
  #allocation0 [shape = 'u32[]', space=smem, size = 0x4, offset = 0x4, fixed_abs, tag = 'smem constant byte address 0x4 - core index']
  #allocation1 [shape = 'u32[72,128]{1,0:T(1,128)}', space=vmem, size = 0x9000, scoped, tag = 'internal scratch']
  %s0 = inlined_call_operand.hbm [shape: f32[8,32], index: 0, kind: input, shape index: {}]
  %s1 = inlined_call_operand.hbm [shape: bf16[32,128], index: 1, kind: input, shape index: {}]
  %s2 = inlined_call_operand.vmem [shape: f32[1,128], index: 2, kind: input, shape index: {}]
  %s3 = inlined_call_operand.hbm [shape: f32[8,128], index: 3, kind: output, shape index: {}]
  %s4 = sld [smem:[#allocation0]]
  $region30: #{tpu_custom_call.1} parent=0
    _
  %s6 = ssub.s32 1, %s4
  %s7 = scalar_select 0, %s6, %s4
  $region1: #{tpu_custom_call.1} parent=0
    #allocation2 [shape = 'u8[4096]{0}', space=vmem, size = 0x1000, scoped, tag = 'input window, operand 0, single buffered']
    #allocation3 [shape = 's32[1]{0}', space=sflag, size = 0x4, scoped, tag = 'scoped memory for tpu_custom_call.1']
    #allocation4 [shape = 's32[1]{0}', space=sflag, size = 0x4, scoped, tag = 'scoped memory for tpu_custom_call.1']
    #allocation5 [shape = 'u8[8192]{0}', space=vmem, size = 0x2000, scoped, tag = 'input window, operand 1, single buffered']
    #allocation6 [shape = 's32[1]{0}', space=sflag, size = 0x4, scoped, tag = 'scoped memory for tpu_custom_call.1']
    #allocation7 [shape = 'u8[4096]{0}', space=vmem, size = 0x1000, scoped, tag = 'output window, operand 0, single buffered']
    %8 = vsyncpa [#allocation3], 0
    %9 = vsyncpa [#allocation6], 0
    %10 = vsyncpa [#allocation4], 0
    // Predicated region
    $region2: #{tpu_custom_call.1} parent=1 // pred_check
      _
    $region3: #{tpu_custom_call.1} parent=1 // pred_check_branch
      %12 = sbr.rel (0) target = $region5
    $region4: #{tpu_custom_call.1} parent=1 // pred_region
      %14 = vsyncadd [#allocation3], 0
      %s16 = sshll.u32 %s0, 4
      %s17 = int_to_ptr.hbm [resolvable:$true] %s16
      %s18 = sshll.u32 [#allocation2], 4
      %s19 = int_to_ptr.vmem [resolvable:$true] %s18
      %21 = dma.hbm_to_vmem [thread:$0]  %s17, 128, %s19, [#allocation3]
    $region5: #{tpu_custom_call.1} parent=1 // pred_fallthru
      _
    // Predicated region
    $region6: #{tpu_custom_call.1} parent=1 // pred_check
      _
    $region7: #{tpu_custom_call.1} parent=1 // pred_check_branch
      %23 = sbr.rel (0) target = $region9
    $region8: #{tpu_custom_call.1} parent=1 // pred_region
      %25 = vsyncadd [#allocation6], 0
      %s26 = sshll.u32 %s1, 4
      %s27 = int_to_ptr.hbm [resolvable:$true] %s26
      %s28 = sshll.u32 [#allocation5], 4
      %s29 = int_to_ptr.vmem [resolvable:$true] %s28
      %34 = dma.hbm_to_vmem [thread:$0]  %s27, 256, %s29, [#allocation6], 64, 64, 4
    $region9: #{tpu_custom_call.1} parent=1 // pred_fallthru
      _
    // Predicated region
    $region10: #{tpu_custom_call.1} parent=1 // pred_check
      _
    $region11: #{tpu_custom_call.1} parent=1 // pred_check_branch
      %36 = sbr.rel (0) target = $region13
    $region12: #{tpu_custom_call.1} parent=1 // pred_region
      _
    $region13: #{tpu_custom_call.1} parent=1 // pred_fallthru
      _
    // Predicated region
    $region14: #{tpu_custom_call.1} parent=1 // pred_check
      _
    $region15: #{tpu_custom_call.1} parent=1 // pred_check_branch
      %38 = sbr.rel (0) target = $region17
    $region16: #{tpu_custom_call.1} parent=1 // pred_region
      %40 = dma.done [#allocation3], 128
    $region17: #{tpu_custom_call.1} parent=1 // pred_fallthru
      _
    // Predicated region
    $region18: #{tpu_custom_call.1} parent=1 // pred_check
      _
    $region19: #{tpu_custom_call.1} parent=1 // pred_check_branch
      %42 = sbr.rel (0) target = $region21
    $region20: #{tpu_custom_call.1} parent=1 // pred_region
      %44 = dma.done [#allocation6], 256
    $region21: #{tpu_custom_call.1} parent=1 // pred_fallthru
      _
    %v46 = vld [vmem:[#allocation2] sm:$0xff]
    %v47 = vpack.c.bf16 %v46, %v46
    %v48 = vld [vmem:[#allocation5] sm:$0xf]
    %v49 = vld [vmem:[#allocation5 + $0x4] sm:$0xf]
    %v50 = vld [vmem:[#allocation5 + $0x8] sm:$0xf]
    %v51 = vld [vmem:[#allocation5 + $0xc] sm:$0xf]
    %v52 = vld [vmem:[%s2] sm:$0x1]
    %v54 = vperm.slane %v52, 0
    %v60 = vunpack.c.l.b16 %v48
    %v61 = vunpack.c.l.b16 %v49
    %v62 = vunpack.c.l.b16 %v50
    %v63 = vunpack.c.l.b16 %v51
    %v64 = vpack.c.b16 %v61, %v60
    %v65 = vpack.c.b16 %v63, %v62
    %vm68 = vcmask 261120
    %v70 = vsel %vm68, %v47, 0
    %72 = vmatpush.bf16.msra.mxu0 0
    %73 = vmatpush.bf16.msra.mxu0 0
    %74 = vmatpush.bf16.msra.mxu0 0
    %75 = vmatpush.bf16.msra.mxu0 0
    %76 = vmatpush.bf16.msra.mxu0 0
    %77 = vmatpush.bf16.msra.mxu0 0
    %78 = vmatpush.bf16.msra.mxu0 %v65
    %79 = vmatpush.bf16.msra.mxu0 %v64
    %80 = vmatmul.bf16.gmra.mxu0 %v70
    %v81 = vpop.f32.mrf.mxu0
    %v82 = vadd.f32 %v54, %v81
    %v83 = vpop.f32.mrf.mxu0
    %84 = vdwg.mxu0
    %85 = vst [vmem:[#allocation7] sm:$0xff] %v82
    // Predicated region
    $region22: #{tpu_custom_call.1} parent=1 // pred_check
      _
    $region23: #{tpu_custom_call.1} parent=1 // pred_check_branch
      %87 = sbr.rel (0) target = $region25
    $region24: #{tpu_custom_call.1} parent=1 // pred_region
      %89 = vsyncadd [#allocation4], 0
      %s91 = sshll.u32 [#allocation7], 4
      %s92 = int_to_ptr.vmem [resolvable:$true] %s91
      %s93 = sshll.u32 %s3, 4
      %s94 = int_to_ptr.hbm [resolvable:$true] %s93
      %96 = dma.vmem_to_hbm [thread:$0]  %s92, 128, %s94, [#allocation4]
    $region25: #{tpu_custom_call.1} parent=1 // pred_fallthru
      _
    // Predicated region
    $region26: #{tpu_custom_call.1} parent=1 // pred_check
      _
    $region27: #{tpu_custom_call.1} parent=1 // pred_check_branch
      %98 = sbr.rel (0) target = $region29
    $region28: #{tpu_custom_call.1} parent=1 // pred_region
      %100 = dma.done [#allocation4], 128
    $region29: #{tpu_custom_call.1} parent=1 // pred_fallthru
      _
    %101 = vsyncpa [#allocation3], 1
    %102 = vsyncpa [#allocation6], 1
    %103 = vsyncpa [#allocation4], 1

</llo_original>
